<compile_context>
chip_gen: v5e
topology: v5e:2x2
jax: 0.10.0
libtpu: 0.0.40
codegen_flags: <defaults>
</compile_context>

<pallas_src>
import jax
import jax.numpy as jnp
from jax.experimental import pallas as pl
from jax.experimental.pallas import tpu as pltpu


def _dueling_dqn_kernel(
    x_ref,        # (TB, S)    f32  activation tile (pipelined over the grid)
    w1_ref,       # (S, H1)    bf16 resident
    b1_ref,       # (1, H1)    f32  resident
    w2_ref,       # (H1, H2)   bf16 resident
    b2_ref,       # (1, H2)    f32  resident
    wh_ref,       # (H2, A+1)  bf16 resident, columns = [advantage | value]
    bh_ref,       # (1, A+1)   f32  resident
    q_ref,        # (TB, A)    f32  raw V + A for this tile (pipelined out)
    advsum_ref,   # (TB, 1)    f32  per-row advantage sum (pipelined out)
):
    num_actions = q_ref.shape[1]

    # fc1 + relu  (bf16 operands, f32 MXU accumulation)
    x = x_ref[...].astype(jnp.bfloat16)
    h1 = jnp.dot(x, w1_ref[...], preferred_element_type=jnp.float32) + b1_ref[...]
    h1 = jnp.maximum(h1, 0.0).astype(jnp.bfloat16)

    # fc2 + relu
    h2 = jnp.dot(h1, w2_ref[...], preferred_element_type=jnp.float32) + b2_ref[...]
    h2 = jnp.maximum(h2, 0.0).astype(jnp.bfloat16)

    # Fused heads: one (TB, A+1) matmul; cols [0, A) = advantage, col A = value.
    heads = jnp.dot(h2, wh_ref[...], preferred_element_type=jnp.float32) + bh_ref[...]
    advantage = heads[:, :num_actions]                   # (TB, A)
    value = heads[:, num_actions:num_actions + 1]        # (TB, 1)

    # Raw (V + A); the global advantage-mean subtraction happens in the
    # wrapper so the grid stays embarrassingly parallel.
    q_ref[...] = (value + advantage).astype(q_ref.dtype)
    # Per-row advantage partial sums (wrapper reduces over the TRUE batch).
    advsum_ref[...] = jnp.sum(advantage, axis=1, keepdims=True)


def _pick_batch_tile(batch, max_tile=1024):
    """Sublane-aligned power-of-2 tile; the batch is padded up to a multiple.

    The network is tiny, so per-grid-step overhead dominates: prefer the
    largest tile (<= max_tile).  Tiles are cheap in VMEM (tb * 64 B input,
    < 1 MiB of activations even at tb = 1024).
    """
    tile = pl.next_power_of_2(max(int(batch), 8))
    return int(min(tile, max(int(max_tile), 8)))


def dueling_dqn_forward(state, params, *, max_batch_tile=1024):
    """state: (B, state_size) float32. params: dict from init_params (f32)."""
    state = state.astype(jnp.float32)
    B, S = state.shape
    H1 = params["w1"].shape[1]
    H2 = params["w2"].shape[1]
    A = params["wa"].shape[1]

    # Pack the two lane-sparse heads into one (H2, A+1) matmul: [adv | value].
    w_heads = jnp.concatenate([params["wa"], params["wv"]], axis=1)
    b_heads = jnp.concatenate([params["ba"], params["bv"]], axis=1)

    # bf16 matmul operands; biases (and all elementwise math) stay f32.
    # (bf16 is the portable choice: v7x MXU has no int8 path, fp8 not needed.)
    w1 = params["w1"].astype(jnp.bfloat16)
    w2 = params["w2"].astype(jnp.bfloat16)
    wh = w_heads.astype(jnp.bfloat16)
    b1 = params["b1"].astype(jnp.float32)
    b2 = params["b2"].astype(jnp.float32)
    bh = b_heads.astype(jnp.float32)

    # Pad the batch up to a tile multiple; padded rows are sliced off below and
    # never contribute to the advantage mean.
    tb = _pick_batch_tile(B, max_batch_tile)
    num_tiles = pl.cdiv(B, tb)
    b_pad = num_tiles * tb
    state_p = jnp.pad(state, ((0, b_pad - B), (0, 0))) if b_pad != B else state

    def resident(arr):
        # Same block every grid step -> fetched once, stays in VMEM.
        return pl.BlockSpec(arr.shape, lambda i: (0, 0))

    in_specs = [
        pl.BlockSpec((tb, S), lambda i: (i, 0)),   # batch tile, pipelined
        resident(w1), resident(b1),
        resident(w2), resident(b2),
        resident(wh), resident(bh),
    ]
    out_specs = (
        pl.BlockSpec((tb, A), lambda i: (i, 0)),   # raw V + A, pipelined
        pl.BlockSpec((tb, 1), lambda i: (i, 0)),   # per-row advantage sums
    )
    out_shape = (
        jax.ShapeDtypeStruct((b_pad, A), jnp.float32),
        jax.ShapeDtypeStruct((b_pad, 1), jnp.float32),
    )

    flops = 2 * b_pad * (S * H1 + H1 * H2 + H2 * (A + 1))
    bytes_accessed = (
        state_p.size * 4 + b_pad * (A + 1) * 4
        + (w1.size + w2.size + wh.size) * 2
        + (b1.size + b2.size + bh.size) * 4
    )

    raw_q, adv_rowsum = pl.pallas_call(
        _dueling_dqn_kernel,
        out_shape=out_shape,
        grid=(num_tiles,),
        in_specs=in_specs,
        out_specs=out_specs,
        compiler_params=pltpu.CompilerParams(
            # No cross-tile state -> batch axis can be megacore-split on v7x.
            dimension_semantics=("parallel",),
        ),
        cost_estimate=pl.CostEstimate(
            flops=int(flops), transcendentals=0,
            bytes_accessed=int(bytes_accessed)),
    )(state_p, w1, b1, w2, b2, wh, bh)

    # Global advantage mean over ALL true B*A elements (torch advantage.mean()),
    # computed from the true-batch rows only, then subtracted as one tiny XLA op.
    adv_mean = jnp.sum(adv_rowsum[:B]) / jnp.float32(B * A)
    return raw_q[:B] - adv_mean


def init_params(key, state_size, action_size, hidden_1_size=128, hidden_2_size=128):
    """Deterministic synthetic init (shapes match the nn.Linear layers)."""
    ks = jax.random.split(key, 8)

    def lin(kw, kb, fan_in, fan_out):
        bound = 1.0 / jnp.sqrt(float(fan_in))
        w = jax.random.uniform(kw, (fan_in, fan_out), jnp.float32, -bound, bound)
        b = jax.random.uniform(kb, (1, fan_out), jnp.float32, -bound, bound)
        return w, b

    w1, b1 = lin(ks[0], ks[1], state_size, hidden_1_size)
    w2, b2 = lin(ks[2], ks[3], hidden_1_size, hidden_2_size)
    wv, bv = lin(ks[4], ks[5], hidden_2_size, 1)
    wa, ba = lin(ks[6], ks[7], hidden_2_size, action_size)
    return dict(w1=w1, b1=b1, w2=w2, b2=b2, wv=wv, bv=bv, wa=wa, ba=ba)


def reference_forward_f32(state, p):
    """Pure f32 JAX reference (matches the PyTorch module's math)."""
    h1 = jax.nn.relu(state @ p["w1"] + p["b1"])
    h2 = jax.nn.relu(h1 @ p["w2"] + p["b2"])
    value = h2 @ p["wv"] + p["bv"]
    advantage = h2 @ p["wa"] + p["ba"]
    return value + advantage - advantage.mean()


def reference_forward_bf16(state, p):
    """Reference mimicking the kernel's bf16-operand / f32-accumulate matmuls."""
    bf16 = jnp.bfloat16

    def mm(x, w):
        return jnp.dot(x.astype(bf16), w.astype(bf16),
                       preferred_element_type=jnp.float32)

    h1 = jax.nn.relu(mm(state, p["w1"]) + p["b1"])
    h2 = jax.nn.relu(mm(h1, p["w2"]) + p["b2"])
    value = mm(h2, p["wv"]) + p["bv"]
    advantage = mm(h2, p["wa"]) + p["ba"]
    return value + advantage - advantage.mean()


if __name__ == "__main__":
    key = jax.random.PRNGKey(0)
    k_params, k_state1, k_state2 = jax.random.split(key, 3)

    state_size, action_size = 16, 4
    params = init_params(k_params, state_size, action_size)

    # Small single-tile case (typical DQN action-selection batch, padded to 8).
    state = jax.random.normal(k_state1, (2, state_size), jnp.float32)
    out = jax.block_until_ready(dueling_dqn_forward(state, params))
    assert out.shape == (2, action_size)
    ref_bf16 = reference_forward_bf16(state, params)
    ref_f32 = reference_forward_f32(state, params)
    assert jnp.allclose(out, ref_bf16, atol=1e-3, rtol=1e-3), (out, ref_bf16)
    assert jnp.allclose(out, ref_f32, atol=3e-2, rtol=3e-2), (out, ref_f32)

    # Multi-tile, non-divisible batch: exercises padding + the wrapper-side
    # global-mean path with several parallel grid steps.
    state2 = jax.random.normal(k_state2, (20, state_size), jnp.float32)
    out2 = jax.block_until_ready(
        dueling_dqn_forward(state2, params, max_batch_tile=8))
    ref2 = reference_forward_bf16(state2, params)
    assert out2.shape == (20, action_size)
    assert jnp.allclose(out2, ref2, atol=1e-3, rtol=1e-3), (out2, ref2)

    print("KERNEL_OK")
</pallas_src>

<mosaic_0001>
module attributes {stable_mosaic.version = 11 : i64} {
  func.func @_dueling_dqn_kernel(%arg0: i32, %arg1: memref<8x16xf32, #tpu.memory_space<vmem>>, %arg2: memref<16x128xbf16, #tpu.memory_space<vmem>>, %arg3: memref<1x128xf32, #tpu.memory_space<vmem>>, %arg4: memref<128x128xbf16, #tpu.memory_space<vmem>>, %arg5: memref<1x128xf32, #tpu.memory_space<vmem>>, %arg6: memref<128x5xbf16, #tpu.memory_space<vmem>>, %arg7: memref<1x5xf32, #tpu.memory_space<vmem>>, %arg8: memref<8x4xf32, #tpu.memory_space<vmem>>, %arg9: memref<8x1xf32, #tpu.memory_space<vmem>>) attributes {dimension_semantics = [#tpu.dimension_semantics<parallel>], iteration_bounds = array<i64: 1>, scalar_prefetch = 0 : i64, scratch_operands = 0 : i64, tpu.core_type = #tpu.core_type<tc>, window_params = [{transform_indices = @transform_0, window_bounds = array<i64: 8, 16>}, {pipeline_mode = #tpu.pipeline_mode<synchronous>, transform_indices = @transform_1, window_bounds = array<i64: 16, 128>}, {pipeline_mode = #tpu.pipeline_mode<synchronous>, transform_indices = @transform_2, window_bounds = array<i64: 1, 128>}, {pipeline_mode = #tpu.pipeline_mode<synchronous>, transform_indices = @transform_3, window_bounds = array<i64: 128, 128>}, {pipeline_mode = #tpu.pipeline_mode<synchronous>, transform_indices = @transform_4, window_bounds = array<i64: 1, 128>}, {pipeline_mode = #tpu.pipeline_mode<synchronous>, transform_indices = @transform_5, window_bounds = array<i64: 128, 5>}, {pipeline_mode = #tpu.pipeline_mode<synchronous>, transform_indices = @transform_6, window_bounds = array<i64: 1, 5>}, {transform_indices = @transform_7, window_bounds = array<i64: 8, 4>}, {transform_indices = @transform_8, window_bounds = array<i64: 8, 1>}]} {
    %c0 = arith.constant 0 : index
    %c0_0 = arith.constant 0 : index
    %0 = vector.load %arg1[%c0, %c0_0] : memref<8x16xf32, #tpu.memory_space<vmem>>, vector<8x16xf32>
    %1 = arith.truncf %0 : vector<8x16xf32> to vector<8x16xbf16>
    %c0_1 = arith.constant 0 : index
    %c0_2 = arith.constant 0 : index
    %2 = vector.load %arg2[%c0_1, %c0_2] : memref<16x128xbf16, #tpu.memory_space<vmem>>, vector<16x128xbf16>
    %cst = arith.constant dense<0.000000e+00> : vector<8x128xf32>
    %3 = tpu.matmul %1, %2, %cst {dimension_numbers = #tpu.dot_dimension_numbers<[1], [0], [0], [1], [0, 0, 1, 1], [], []>} : vector<8x16xbf16>, vector<16x128xbf16>, vector<8x128xf32> -> vector<8x128xf32>
    %c0_3 = arith.constant 0 : index
    %c0_4 = arith.constant 0 : index
    %4 = vector.load %arg3[%c0_3, %c0_4] : memref<1x128xf32, #tpu.memory_space<vmem>>, vector<1x128xf32>
    %5 = vector.broadcast %4 : vector<1x128xf32> to vector<8x128xf32>
    %6 = arith.addf %3, %5 : vector<8x128xf32>
    %cst_5 = arith.constant 0.000000e+00 : f32
    %7 = vector.broadcast %cst_5 : f32 to vector<8x128xf32>
    %8 = arith.maximumf %6, %7 : vector<8x128xf32>
    %9 = arith.truncf %8 : vector<8x128xf32> to vector<8x128xbf16>
    %c0_6 = arith.constant 0 : index
    %c0_7 = arith.constant 0 : index
    %10 = vector.load %arg4[%c0_6, %c0_7] : memref<128x128xbf16, #tpu.memory_space<vmem>>, vector<128x128xbf16>
    %cst_8 = arith.constant dense<0.000000e+00> : vector<8x128xf32>
    %11 = tpu.matmul %9, %10, %cst_8 {dimension_numbers = #tpu.dot_dimension_numbers<[1], [0], [0], [1], [0, 0, 1, 1], [], []>} : vector<8x128xbf16>, vector<128x128xbf16>, vector<8x128xf32> -> vector<8x128xf32>
    %c0_9 = arith.constant 0 : index
    %c0_10 = arith.constant 0 : index
    %12 = vector.load %arg5[%c0_9, %c0_10] : memref<1x128xf32, #tpu.memory_space<vmem>>, vector<1x128xf32>
    %13 = vector.broadcast %12 : vector<1x128xf32> to vector<8x128xf32>
    %14 = arith.addf %11, %13 : vector<8x128xf32>
    %cst_11 = arith.constant 0.000000e+00 : f32
    %15 = vector.broadcast %cst_11 : f32 to vector<8x128xf32>
    %16 = arith.maximumf %14, %15 : vector<8x128xf32>
    %17 = arith.truncf %16 : vector<8x128xf32> to vector<8x128xbf16>
    %c0_12 = arith.constant 0 : index
    %c0_13 = arith.constant 0 : index
    %18 = vector.load %arg6[%c0_12, %c0_13] : memref<128x5xbf16, #tpu.memory_space<vmem>>, vector<128x5xbf16>
    %cst_14 = arith.constant dense<0.000000e+00> : vector<8x5xf32>
    %19 = tpu.matmul %17, %18, %cst_14 {dimension_numbers = #tpu.dot_dimension_numbers<[1], [0], [0], [1], [0, 0, 1, 1], [], []>} : vector<8x128xbf16>, vector<128x5xbf16>, vector<8x5xf32> -> vector<8x5xf32>
    %c0_15 = arith.constant 0 : index
    %c0_16 = arith.constant 0 : index
    %20 = vector.load %arg7[%c0_15, %c0_16] : memref<1x5xf32, #tpu.memory_space<vmem>>, vector<1x5xf32>
    %21 = vector.broadcast %20 : vector<1x5xf32> to vector<8x5xf32>
    %22 = arith.addf %19, %21 : vector<8x5xf32>
    %23 = vector.extract_strided_slice %22 {offsets = [0, 0], sizes = [8, 4], strides = [1, 1]} : vector<8x5xf32> to vector<8x4xf32>
    %24 = vector.extract_strided_slice %22 {offsets = [0, 4], sizes = [8, 1], strides = [1, 1]} : vector<8x5xf32> to vector<8x1xf32>
    %25 = vector.broadcast %24 : vector<8x1xf32> to vector<8x4xf32>
    %26 = arith.addf %25, %23 : vector<8x4xf32>
    %c0_17 = arith.constant 0 : index
    %c0_18 = arith.constant 0 : index
    %27 = vector.load %arg8[%c0_17, %c0_18] : memref<8x4xf32, #tpu.memory_space<vmem>>, vector<8x4xf32>
    tpu.vector_store %arg8[%c0_17, %c0_18], %26 {strides = array<i32>} : memref<8x4xf32, #tpu.memory_space<vmem>>, vector<8x4xf32>,
    %cst_19 = arith.constant dense<0.000000e+00> : vector<8xf32>
    %28 = vector.multi_reduction <add>, %23, %cst_19 [1] : vector<8x4xf32> to vector<8xf32>
    %29 = vector.shape_cast %28 : vector<8xf32> to vector<8x1xf32>
    %c0_20 = arith.constant 0 : index
    %c0_21 = arith.constant 0 : index
    %30 = vector.load %arg9[%c0_20, %c0_21] : memref<8x1xf32, #tpu.memory_space<vmem>>, vector<8x1xf32>
    tpu.vector_store %arg9[%c0_20, %c0_21], %29 {strides = array<i32>} : memref<8x1xf32, #tpu.memory_space<vmem>>, vector<8x1xf32>,
    return
  }
  func.func @transform_0(%arg0: i32) -> (i32, i32) {
    %c0_i32 = arith.constant 0 : i32
    %c0_i32_0 = arith.constant 0 : i32
    return %arg0, %c0_i32 : i32, i32
  }
  func.func @transform_1(%arg0: i32) -> (i32, i32) {
    %c0_i32 = arith.constant 0 : i32
    %c0_i32_0 = arith.constant 0 : i32
    %c0_i32_1 = arith.constant 0 : i32
    return %c0_i32, %c0_i32_0 : i32, i32
  }
  func.func @transform_2(%arg0: i32) -> (i32, i32) {
    %c0_i32 = arith.constant 0 : i32
    %c0_i32_0 = arith.constant 0 : i32
    %c0_i32_1 = arith.constant 0 : i32
    return %c0_i32, %c0_i32_0 : i32, i32
  }
  func.func @transform_3(%arg0: i32) -> (i32, i32) {
    %c0_i32 = arith.constant 0 : i32
    %c0_i32_0 = arith.constant 0 : i32
    %c0_i32_1 = arith.constant 0 : i32
    return %c0_i32, %c0_i32_0 : i32, i32
  }
  func.func @transform_4(%arg0: i32) -> (i32, i32) {
    %c0_i32 = arith.constant 0 : i32
    %c0_i32_0 = arith.constant 0 : i32
    %c0_i32_1 = arith.constant 0 : i32
    return %c0_i32, %c0_i32_0 : i32, i32
  }
  func.func @transform_5(%arg0: i32) -> (i32, i32) {
    %c0_i32 = arith.constant 0 : i32
    %c0_i32_0 = arith.constant 0 : i32
    %c0_i32_1 = arith.constant 0 : i32
    return %c0_i32, %c0_i32_0 : i32, i32
  }
  func.func @transform_6(%arg0: i32) -> (i32, i32) {
    %c0_i32 = arith.constant 0 : i32
    %c0_i32_0 = arith.constant 0 : i32
    %c0_i32_1 = arith.constant 0 : i32
    return %c0_i32, %c0_i32_0 : i32, i32
  }
  func.func @transform_7(%arg0: i32) -> (i32, i32) {
    %c0_i32 = arith.constant 0 : i32
    %c0_i32_0 = arith.constant 0 : i32
    return %arg0, %c0_i32 : i32, i32
  }
  func.func @transform_8(%arg0: i32) -> (i32, i32) {
    %c0_i32 = arith.constant 0 : i32
    %c0_i32_0 = arith.constant 0 : i32
    return %arg0, %c0_i32 : i32, i32
  }
}

</mosaic_0001>

<llo_original>
// kernel: tpu_custom_call.1
$region0: #{tpu_custom_call.1}
  #allocation0 [shape = 'u32[]', space=smem, size = 0x4, offset = 0x4, fixed_abs, tag = 'smem constant byte address 0x4 - core index']
  #allocation1 [shape = 'u32[72,128]{1,0:T(1,128)}', space=vmem, size = 0x9000, scoped, tag = 'internal scratch']
  %s0 = inlined_call_operand.hbm [shape: f32[8,16], index: 0, kind: input, shape index: {}]
  %s1 = inlined_call_operand.hbm [shape: bf16[16,128], index: 1, kind: input, shape index: {}]
  %s2 = inlined_call_operand.vmem [shape: f32[1,128], index: 2, kind: input, shape index: {}]
  %s3 = inlined_call_operand.vmem [shape: bf16[128,128], index: 3, kind: input, shape index: {}]
  %s4 = inlined_call_operand.vmem [shape: f32[1,128], index: 4, kind: input, shape index: {}]
  %s5 = inlined_call_operand.vmem [shape: bf16[128,5], index: 5, kind: input, shape index: {}]
  %s6 = inlined_call_operand.vmem [shape: f32[1,5], index: 6, kind: input, shape index: {}]
  %s7 = inlined_call_operand.vmem [shape: f32[8,4], index: 7, kind: output, shape index: {0}]
  %s8 = inlined_call_operand.vmem [shape: f32[8,1], index: 8, kind: output, shape index: {1}]
  %9 = xla_tuple %s7, %s8
  %s10 = sld [smem:[#allocation0]]
  $region54: #{tpu_custom_call.1} parent=0
    _
  %s12 = ssub.s32 1, %s10
  %s13 = scalar_select 0, %s12, %s10
  $region1: #{tpu_custom_call.1} parent=0
    #allocation2 [shape = 'u8[4096]{0}', space=vmem, size = 0x1000, scoped, tag = 'input window, operand 0, single buffered']
    #allocation3 [shape = 's32[1]{0}', space=sflag, size = 0x4, scoped, tag = 'scoped memory for tpu_custom_call.1']
    #allocation4 [shape = 'u8[4096]{0}', space=vmem, size = 0x1000, scoped, tag = 'input window, operand 1, single buffered']
    #allocation5 [shape = 's32[1]{0}', space=sflag, size = 0x4, scoped, tag = 'scoped memory for tpu_custom_call.1']
    %14 = vsyncpa [#allocation3], 0
    %15 = vsyncpa [#allocation5], 0
    // Predicated region
    $region2: #{tpu_custom_call.1} parent=1 // pred_check
      _
    $region3: #{tpu_custom_call.1} parent=1 // pred_check_branch
      %17 = sbr.rel (0) target = $region5
    $region4: #{tpu_custom_call.1} parent=1 // pred_region
      %19 = vsyncadd [#allocation3], 0
      %s21 = sshll.u32 %s0, 4
      %s22 = int_to_ptr.hbm [resolvable:$true] %s21
      %s23 = sshll.u32 [#allocation2], 4
      %s24 = int_to_ptr.vmem [resolvable:$true] %s23
      %26 = dma.hbm_to_vmem [thread:$0]  %s22, 128, %s24, [#allocation3]
    $region5: #{tpu_custom_call.1} parent=1 // pred_fallthru
      _
    // Predicated region
    $region6: #{tpu_custom_call.1} parent=1 // pred_check
      _
    $region7: #{tpu_custom_call.1} parent=1 // pred_check_branch
      %28 = sbr.rel (0) target = $region9
    $region8: #{tpu_custom_call.1} parent=1 // pred_region
      %30 = vsyncadd [#allocation5], 0
      %s31 = sshll.u32 %s1, 4
      %s32 = int_to_ptr.hbm [resolvable:$true] %s31
      %s33 = sshll.u32 [#allocation4], 4
      %s34 = int_to_ptr.vmem [resolvable:$true] %s33
      %39 = dma.hbm_to_vmem [thread:$0]  %s32, 128, %s34, [#allocation5], 64, 64, 4
    $region9: #{tpu_custom_call.1} parent=1 // pred_fallthru
      _
    // Predicated region
    $region10: #{tpu_custom_call.1} parent=1 // pred_check
      _
    $region11: #{tpu_custom_call.1} parent=1 // pred_check_branch
      %41 = sbr.rel (0) target = $region13
    $region12: #{tpu_custom_call.1} parent=1 // pred_region
      _
    $region13: #{tpu_custom_call.1} parent=1 // pred_fallthru
      _
    // Predicated region
    $region14: #{tpu_custom_call.1} parent=1 // pred_check
      _
    $region15: #{tpu_custom_call.1} parent=1 // pred_check_branch
      %43 = sbr.rel (0) target = $region17
    $region16: #{tpu_custom_call.1} parent=1 // pred_region
      _
    $region17: #{tpu_custom_call.1} parent=1 // pred_fallthru
      _
    // Predicated region
    $region18: #{tpu_custom_call.1} parent=1 // pred_check
      _
    $region19: #{tpu_custom_call.1} parent=1 // pred_check_branch
      %45 = sbr.rel (0) target = $region21
    $region20: #{tpu_custom_call.1} parent=1 // pred_region
      _
    $region21: #{tpu_custom_call.1} parent=1 // pred_fallthru
      _
    // Predicated region
    $region22: #{tpu_custom_call.1} parent=1 // pred_check
      _
    $region23: #{tpu_custom_call.1} parent=1 // pred_check_branch
      %47 = sbr.rel (0) target = $region25
    $region24: #{tpu_custom_call.1} parent=1 // pred_region
      _
    $region25: #{tpu_custom_call.1} parent=1 // pred_fallthru
      _
    // Predicated region
    $region26: #{tpu_custom_call.1} parent=1 // pred_check
      _
    $region27: #{tpu_custom_call.1} parent=1 // pred_check_branch
      %49 = sbr.rel (0) target = $region29
    $region28: #{tpu_custom_call.1} parent=1 // pred_region
      _
    $region29: #{tpu_custom_call.1} parent=1 // pred_fallthru
      _
    // Predicated region
    $region30: #{tpu_custom_call.1} parent=1 // pred_check
      _
    $region31: #{tpu_custom_call.1} parent=1 // pred_check_branch
      %51 = sbr.rel (0) target = $region33
    $region32: #{tpu_custom_call.1} parent=1 // pred_region
      %53 = dma.done [#allocation3], 128
    $region33: #{tpu_custom_call.1} parent=1 // pred_fallthru
      _
    // Predicated region
    $region34: #{tpu_custom_call.1} parent=1 // pred_check
      _
    $region35: #{tpu_custom_call.1} parent=1 // pred_check_branch
      %55 = sbr.rel (0) target = $region37
    $region36: #{tpu_custom_call.1} parent=1 // pred_region
      %57 = dma.done [#allocation5], 128
    $region37: #{tpu_custom_call.1} parent=1 // pred_fallthru
      _
    %v59 = vld [vmem:[#allocation2] sm:$0xff]
    %v60 = vpack.c.bf16 %v59, %v59
    %v61 = vld [vmem:[#allocation4] sm:$0xf]
    %v62 = vld [vmem:[#allocation4 + $0x4] sm:$0xf]
    %v63 = vld [vmem:[%s2] sm:$0x1]
    %v65 = vperm.slane %v63, 0
    %v69 = vunpack.c.l.b16 %v61
    %v70 = vunpack.c.l.b16 %v62
    %v71 = vpack.c.b16 %v70, %v69
    %vm73 = vcmask 130048
    %v75 = vsel %vm73, %v60, 0
    %77 = vmatpush.bf16.msra.mxu0 0
    %78 = vmatpush.bf16.msra.mxu0 0
    %79 = vmatpush.bf16.msra.mxu0 0
    %80 = vmatpush.bf16.msra.mxu0 0
    %81 = vmatpush.bf16.msra.mxu0 0
    %82 = vmatpush.bf16.msra.mxu0 0
    %83 = vmatpush.bf16.msra.mxu0 0
    %84 = vmatpush.bf16.msra.mxu0 %v71
    %85 = vmatmul.bf16.gmra.mxu0 %v75
    %v86 = vpop.f32.mrf.mxu0
    %v87 = vadd.f32 %v65, %v86
    %v88 = vpop.f32.mrf.mxu0
    %89 = vdwg.mxu0
    %v90 = vmax.f32 %v87, 0.0
    %v91 = vpack.c.bf16 %v90, %v90
    %v92 = vld [vmem:[%s3] sm:$0xf]
    %v93 = vld [vmem:[%s3 + $0x4] sm:$0xf]
    %v94 = vld [vmem:[%s3 + $0x8] sm:$0xf]
    %v95 = vld [vmem:[%s3 + $0xc] sm:$0xf]
    %v96 = vld [vmem:[%s3 + $0x10] sm:$0xf]
    %v97 = vld [vmem:[%s3 + $0x14] sm:$0xf]
    %v98 = vld [vmem:[%s3 + $0x18] sm:$0xf]
    %v99 = vld [vmem:[%s3 + $0x1c] sm:$0xf]
    %v100 = vld [vmem:[%s3 + $0x20] sm:$0xf]
    %v101 = vld [vmem:[%s3 + $0x24] sm:$0xf]
    %v102 = vld [vmem:[%s3 + $0x28] sm:$0xf]
    %v103 = vld [vmem:[%s3 + $0x2c] sm:$0xf]
    %v104 = vld [vmem:[%s3 + $0x30] sm:$0xf]
    %v105 = vld [vmem:[%s3 + $0x34] sm:$0xf]
    %v106 = vld [vmem:[%s3 + $0x38] sm:$0xf]
    %v107 = vld [vmem:[%s3 + $0x3c] sm:$0xf]
    %v108 = vld [vmem:[%s4] sm:$0x1]
    %v110 = vperm.slane %v108, 0
    %v128 = vunpack.c.l.b16 %v92
    %v129 = vunpack.c.l.b16 %v93
    %v130 = vunpack.c.l.b16 %v94
    %v131 = vunpack.c.l.b16 %v95
    %v132 = vunpack.c.l.b16 %v96
    %v133 = vunpack.c.l.b16 %v97
    %v134 = vunpack.c.l.b16 %v98
    %v135 = vunpack.c.l.b16 %v99
    %v136 = vunpack.c.l.b16 %v100
    %v137 = vunpack.c.l.b16 %v101
    %v138 = vunpack.c.l.b16 %v102
    %v139 = vunpack.c.l.b16 %v103
    %v140 = vunpack.c.l.b16 %v104
    %v141 = vunpack.c.l.b16 %v105
    %v142 = vunpack.c.l.b16 %v106
    %v143 = vunpack.c.l.b16 %v107
    %v144 = vpack.c.b16 %v129, %v128
    %v145 = vpack.c.b16 %v131, %v130
    %v146 = vpack.c.b16 %v133, %v132
    %v147 = vpack.c.b16 %v135, %v134
    %v148 = vpack.c.b16 %v137, %v136
    %v149 = vpack.c.b16 %v139, %v138
    %v150 = vpack.c.b16 %v141, %v140
    %v151 = vpack.c.b16 %v143, %v142
    %160 = vmatpush.bf16.msra.mxu0 %v151
    %161 = vmatpush.bf16.msra.mxu0 %v150
    %162 = vmatpush.bf16.msra.mxu0 %v149
    %163 = vmatpush.bf16.msra.mxu0 %v148
    %164 = vmatpush.bf16.msra.mxu0 %v147
    %165 = vmatpush.bf16.msra.mxu0 %v146
    %166 = vmatpush.bf16.msra.mxu0 %v145
    %167 = vmatpush.bf16.msra.mxu0 %v144
    %168 = vmatmul.bf16.gmra.mxu0 %v91
    %v169 = vpop.f32.mrf.mxu0
    %v170 = vadd.f32 %v110, %v169
    %v171 = vpop.f32.mrf.mxu0
    %172 = vdwg.mxu0
    %v173 = vmax.f32 %v170, 0.0
    %v174 = vpack.c.bf16 %v173, %v173
    %v175 = vld [vmem:[%s5] sm:$0xf]
    %v176 = vld [vmem:[%s5 + $0x4] sm:$0xf]
    %v177 = vld [vmem:[%s5 + $0x8] sm:$0xf]
    %v178 = vld [vmem:[%s5 + $0xc] sm:$0xf]
    %v179 = vld [vmem:[%s5 + $0x10] sm:$0xf]
    %v180 = vld [vmem:[%s5 + $0x14] sm:$0xf]
    %v181 = vld [vmem:[%s5 + $0x18] sm:$0xf]
    %v182 = vld [vmem:[%s5 + $0x1c] sm:$0xf]
    %v183 = vld [vmem:[%s5 + $0x20] sm:$0xf]
    %v184 = vld [vmem:[%s5 + $0x24] sm:$0xf]
    %v185 = vld [vmem:[%s5 + $0x28] sm:$0xf]
    %v186 = vld [vmem:[%s5 + $0x2c] sm:$0xf]
    %v187 = vld [vmem:[%s5 + $0x30] sm:$0xf]
    %v188 = vld [vmem:[%s5 + $0x34] sm:$0xf]
    %v189 = vld [vmem:[%s5 + $0x38] sm:$0xf]
    %v190 = vld [vmem:[%s5 + $0x3c] sm:$0xf]
    %v191 = vld [vmem:[%s6] sm:$0x1]
    %v193 = vperm.slane %v191, 0
    %v211 = vunpack.c.l.b16 %v175
    %v212 = vunpack.c.l.b16 %v176
    %v213 = vunpack.c.l.b16 %v177
    %v214 = vunpack.c.l.b16 %v178
    %v215 = vunpack.c.l.b16 %v179
    %v216 = vunpack.c.l.b16 %v180
    %v217 = vunpack.c.l.b16 %v181
    %v218 = vunpack.c.l.b16 %v182
    %v219 = vunpack.c.l.b16 %v183
    %v220 = vunpack.c.l.b16 %v184
    %v221 = vunpack.c.l.b16 %v185
    %v222 = vunpack.c.l.b16 %v186
    %v223 = vunpack.c.l.b16 %v187
    %v224 = vunpack.c.l.b16 %v188
    %v225 = vunpack.c.l.b16 %v189
    %v226 = vunpack.c.l.b16 %v190
    %v227 = vpack.c.b16 %v212, %v211
    %v228 = vpack.c.b16 %v214, %v213
    %v229 = vpack.c.b16 %v216, %v215
    %v230 = vpack.c.b16 %v218, %v217
    %v231 = vpack.c.b16 %v220, %v219
    %v232 = vpack.c.b16 %v222, %v221
    %v233 = vpack.c.b16 %v224, %v223
    %v234 = vpack.c.b16 %v226, %v225
    %243 = vmatpush.bf16.msra.mxu0 %v234
    %244 = vmatpush.bf16.msra.mxu0 %v233
    %245 = vmatpush.bf16.msra.mxu0 %v232
    %246 = vmatpush.bf16.msra.mxu0 %v231
    %247 = vmatpush.bf16.msra.mxu0 %v230
    %248 = vmatpush.bf16.msra.mxu0 %v229
    %249 = vmatpush.bf16.msra.mxu0 %v228
    %250 = vmatpush.bf16.msra.mxu0 %v227
    %251 = vmatmul.bf16.gmra.mxu0 %v174
    %v252 = vpop.f32.mrf.mxu0
    %v253 = vadd.f32 %v193, %v252
    %v254 = vpop.f32.mrf.mxu0
    %255 = vdwg.mxu0
    %257 = vset.pattern.permute.xlu0 4
    %258 = vperm.xlu0 %257, %v253
    %v259 = vpop.permute.xlu0 %258
    %v261 = vadd.f32 %v259, %v253
    %vm262 = vcmask 31744
    %263 = vst.msk [vmem:[%s7] sm:$0xff] %vm262, %v261
    %v264 = vsel %vm262, %v253, 0.0
    %265 = vadd.xlane.f32.xlu0 %v264
    %v266 = vpop.xlane.xlu0 %265
    %vm267 = vcmask 7168
    %268 = vst.msk [vmem:[%s8] sm:$0xff] %vm267, %v266
    // Predicated region
    $region38: #{tpu_custom_call.1} parent=1 // pred_check
      _
    $region39: #{tpu_custom_call.1} parent=1 // pred_check_branch
      %270 = sbr.rel (0) target = $region41
    $region40: #{tpu_custom_call.1} parent=1 // pred_region
      _
    $region41: #{tpu_custom_call.1} parent=1 // pred_fallthru
      _
    // Predicated region
    $region42: #{tpu_custom_call.1} parent=1 // pred_check
      _
    $region43: #{tpu_custom_call.1} parent=1 // pred_check_branch
      %272 = sbr.rel (0) target = $region45
    $region44: #{tpu_custom_call.1} parent=1 // pred_region
      _
    $region45: #{tpu_custom_call.1} parent=1 // pred_fallthru
      _
    // Predicated region
    $region46: #{tpu_custom_call.1} parent=1 // pred_check
      _
    $region47: #{tpu_custom_call.1} parent=1 // pred_check_branch
      %274 = sbr.rel (0) target = $region49
    $region48: #{tpu_custom_call.1} parent=1 // pred_region
      _
    $region49: #{tpu_custom_call.1} parent=1 // pred_fallthru
      _
    // Predicated region
    $region50: #{tpu_custom_call.1} parent=1 // pred_check
      _
    $region51: #{tpu_custom_call.1} parent=1 // pred_check_branch
      %276 = sbr.rel (0) target = $region53
    $region52: #{tpu_custom_call.1} parent=1 // pred_region
      _
    $region53: #{tpu_custom_call.1} parent=1 // pred_fallthru
      _
    %277 = vsyncpa [#allocation3], 1
    %278 = vsyncpa [#allocation5], 1

</llo_original>
